<compile_context>
chip_gen: v6e
topology: v6e:2x2x1
jax: 0.10.0
libtpu: 0.0.40
codegen_flags: <defaults>
</compile_context>

<pallas_src>
import functools

import jax
import jax.numpy as jnp
from jax.experimental import pallas as pl
from jax.experimental.pallas import tpu as pltpu


def _conv_kernel(body_ref, halo_ref, w_ref, b_ref, o_ref, *, To, Wo, Cin,
                 nchw_out):
    """One (batch, output-row-tile) step of the 3x3 / stride-2 / pad-1 conv.

    body_ref: (1, To, 2, Wo+1, 2*Cin)  row-pairs [r*To, r*To+To) of the padded
                                       NHWC image (H folded into (pair,parity),
                                       W folded into (col-pair, parity*Cin)).
    halo_ref: (1, 1, 1, Wo+1, 2*Cin)   even row of pair r*To+To (ky=2 tap of
                                       the tile's last output row).
    w_ref   : (3, 3*Cin, Cout)         per-ky weights, rows ordered (kx, cin).
    b_ref   : (1, Cout)                f32 bias.
    o_ref   : (1, Cout, To*Wo) if nchw_out else (1, To*Wo, Cout).
    """
    K = 3 * Cin
    M = To * Wo
    Cout = w_ref.shape[-1]

    def lane_patch(full, half):
        # full: (..., Wo, 2*Cin) = kx0/kx1 taps; half: (..., Wo, Cin) = kx2 tap.
        return jnp.concatenate([full, half], axis=-1).reshape(-1, K)

    acc = jnp.zeros((M, Cout), dtype=jnp.float32)

    # ky = 0, 1: all taps live in the body block (pair t, parity ky).
    for ky in range(2):
        patch = lane_patch(body_ref[0, :, ky, :Wo, :],
                           body_ref[0, :, ky, 1:, :Cin])
        acc += jnp.dot(patch, w_ref[ky], preferred_element_type=jnp.float32)

    # ky = 2: needs pair t+1 / parity 0 -> body pairs [1, To) plus the halo row.
    halo_patch = lane_patch(halo_ref[0, 0, 0, :Wo, :][None],
                            halo_ref[0, 0, 0, 1:, :Cin][None])       # (Wo, K)
    if To > 1:
        main_patch = lane_patch(body_ref[0, 1:, 0, :Wo, :],
                                body_ref[0, 1:, 0, 1:, :Cin])        # ((To-1)*Wo, K)
        patch2 = jnp.concatenate([main_patch, halo_patch], axis=0)
    else:
        patch2 = halo_patch
    acc += jnp.dot(patch2, w_ref[2], preferred_element_type=jnp.float32)

    acc = acc + b_ref[...].astype(jnp.float32)                       # f32 bias
    if nchw_out:
        # Cout < 128: keep lane dim = To*Wo so stores stay unmasked.
        o_ref[0] = acc.T.astype(o_ref.dtype)
    else:
        # Lane dim = Cout (>= 128): no in-kernel transpose.
        o_ref[0] = acc.astype(o_ref.dtype)


def _pick_row_tile(Ho, Wo, Cout, nchw_out):
    """Largest row tile keeping the M tile (To*Wo) within budget while the
    output block stays layout-legal ((*,128) for NC(HW), (8,*) for (HW)C);
    To == Ho (full extent) is always legal."""
    align = 128 if nchw_out else 8
    max_m = 4096 if Cout <= 128 else 2048
    valid = [d for d in range(1, Ho + 1)
             if Ho % d == 0 and (d * Wo % align == 0 or d == Ho)]
    within = [d for d in valid if d * Wo <= max_m]
    if within:
        return max(within)
    # TODO(synk): ragged tail (pl.cdiv grid + masked store) instead of the
    # smallest valid divisor when even To=1 overshoots the budget for huge Wo.
    return min(valid)


def downsample_forward(x_nchw, weight, bias, *, operand_dtype=None):
    """Conv2d(dim, dim, 3, stride=2, padding=1) — same semantics as PyTorch.

    x_nchw : [N, Cin, H, W]     (f32 or bf16)
    weight : [Cout, Cin, 3, 3]  (PyTorch OIHW layout)
    bias   : [Cout]
    operand_dtype: dtype of the MXU operands (accumulation / bias stay f32).
        Defaults to x.dtype; pass jnp.bfloat16 for the mem-bound fast path.
    returns: [N, Cout, Ho, Wo] in x.dtype.
    """
    N, Cin, H, W = x_nchw.shape
    Cout, Cin_w, kh, kw = weight.shape
    assert Cin_w == Cin and kh == 3 and kw == 3
    Ho = (H + 2 - 3) // 2 + 1
    Wo = (W + 2 - 3) // 2 + 1

    out_dtype = x_nchw.dtype
    operand_dtype = jnp.dtype(x_nchw.dtype if operand_dtype is None
                              else operand_dtype)

    # NCHW -> NHWC (see module-level TODO about keeping the UNet NHWC).
    x = jnp.transpose(x_nchw, (0, 2, 3, 1)).astype(operand_dtype)
    # Zero-pad so padded extents are exactly 2*(Ho+1) x 2*(Wo+1); the extra
    # bottom/right rows (present only for odd H/W) are never read.
    pad_b = 2 * Ho + 1 - H
    pad_r = 2 * Wo + 1 - W
    x_p = jnp.pad(x, ((0, 0), (1, pad_b), (1, pad_r), (0, 0)))
    # Fold H and W into (pair, parity): pure metadata reshape, no data moves.
    x5 = x_p.reshape(N, Ho + 1, 2, Wo + 1, 2 * Cin)

    # Weights: OIHW -> (ky, kx*Cin, Cout); rows within a ky ordered (kx, cin).
    w_packed = (jnp.transpose(weight, (2, 3, 1, 0))
                .reshape(3, 3 * Cin, Cout).astype(operand_dtype))
    b2d = bias.reshape(1, Cout).astype(jnp.float32)

    nchw_out = Cout < 128          # lane-dense guard for narrow channel counts
    To = _pick_row_tile(Ho, Wo, Cout, nchw_out)
    R = Ho // To
    M = To * Wo

    # --- VMEM budget: pipelined blocks (x2), resident weights/bias, f32 acc,
    # patch temporaries, acc.T temporary, headroom. ---
    in_item = operand_dtype.itemsize
    out_item = jnp.dtype(out_dtype).itemsize
    body_blk = To * 2 * (Wo + 1) * 2 * Cin * in_item
    halo_blk = (Wo + 1) * 2 * Cin * in_item
    out_blk = M * Cout * out_item
    est = (2 * (body_blk + halo_blk + out_blk)
           + w_packed.size * in_item + Cout * 4
           + M * Cout * 4
           + 2 * M * 3 * Cin * in_item
           + (out_blk if nchw_out else 0)
           + (4 << 20))
    try:
        vmem_cap = int(pltpu.get_tpu_info().vmem_capacity_bytes)
    except Exception:                                   # pragma: no cover
        vmem_cap = 64 << 20                             # conservative (v7x)
    vmem_limit = int(max(16 << 20, min(int(est), int(vmem_cap * 0.85))))

    cost = pl.CostEstimate(
        flops=2 * N * Ho * Wo * 9 * Cin * Cout,
        transcendentals=0,
        bytes_accessed=(x5.size * in_item + w_packed.size * in_item + Cout * 4
                        + N * Ho * Wo * Cout * out_item))

    kernel = functools.partial(_conv_kernel, To=To, Wo=Wo, Cin=Cin,
                               nchw_out=nchw_out)

    in_specs = [
        # Body: To row-pairs of this output-row tile (re-DMA'd per tile).
        pl.BlockSpec((1, To, 2, Wo + 1, 2 * Cin),
                     lambda n, r: (n, r, 0, 0, 0)),
        # Halo: even row of pair r*To + To (block size 1 -> element index).
        pl.BlockSpec((1, 1, 1, Wo + 1, 2 * Cin),
                     lambda n, r: (n, (r + 1) * To, 0, 0, 0)),
        # Whole weight / bias resident in VMEM: one copy, not pipelined.
        pl.BlockSpec(memory_space=pltpu.MemorySpace.VMEM),
        pl.BlockSpec(memory_space=pltpu.MemorySpace.VMEM),
    ]
    if nchw_out:
        out_shape = jax.ShapeDtypeStruct((N, Cout, Ho * Wo), out_dtype)
        out_specs = pl.BlockSpec((1, Cout, M), lambda n, r: (n, 0, r))
    else:
        out_shape = jax.ShapeDtypeStruct((N, Ho * Wo, Cout), out_dtype)
        out_specs = pl.BlockSpec((1, M, Cout), lambda n, r: (n, r, 0))

    out = pl.pallas_call(
        kernel,
        out_shape=out_shape,
        grid_spec=pltpu.PrefetchScalarGridSpec(
            num_scalar_prefetch=0,
            grid=(N, R),
            in_specs=in_specs,
            out_specs=out_specs),
        compiler_params=pltpu.CompilerParams(
            dimension_semantics=("parallel", "parallel"),
            vmem_limit_bytes=vmem_limit),
        cost_estimate=cost,
    )(x5, x5, w_packed, b2d)

    if nchw_out:
        return out.reshape(N, Cout, Ho, Wo)
    return jnp.transpose(out.reshape(N, Ho, Wo, Cout), (0, 3, 1, 2))


def _reference_conv(x_nchw, weight, bias):
    y = jax.lax.conv_general_dilated(
        x_nchw.astype(jnp.float32), weight.astype(jnp.float32),
        window_strides=(2, 2), padding=((1, 1), (1, 1)),
        dimension_numbers=("NCHW", "OIHW", "NCHW"),
        precision=jax.lax.Precision.HIGHEST)
    return y + bias.reshape(1, -1, 1, 1).astype(jnp.float32)


if __name__ == "__main__":
    key = jax.random.PRNGKey(0)
    kx, kw_, kb = jax.random.split(key, 3)

    # --- Primary test: dim=4 (Cout < 128 -> NC(HW) lane-dense output path). ---
    N, C, H, W = 2, 4, 16, 16
    x = jax.random.normal(kx, (N, C, H, W), dtype=jnp.float32)
    fan_in = C * 3 * 3
    bound = 1.0 / (fan_in ** 0.5)
    weight = jax.random.uniform(kw_, (C, C, 3, 3), minval=-bound, maxval=bound,
                                dtype=jnp.float32)
    bias = jax.random.uniform(kb, (C,), minval=-bound, maxval=bound,
                              dtype=jnp.float32)
    y_ref = _reference_conv(x, weight, bias)

    y = downsample_forward(x, weight, bias)
    jax.block_until_ready(y)
    assert y.shape == (N, C, H // 2, W // 2)
    assert jnp.allclose(y, y_ref, atol=1e-4, rtol=1e-4)

    # bf16 operands (f32 accumulation / f32 bias) — the mem-bound fast path.
    y_bf16 = downsample_forward(x.astype(jnp.bfloat16),
                                weight.astype(jnp.bfloat16), bias)
    jax.block_until_ready(y_bf16)
    assert jnp.allclose(y_bf16.astype(jnp.float32), y_ref, atol=5e-2, rtol=5e-2)

    # --- Secondary test: dim=128 (Cout >= 128 -> (HW)C output, no in-kernel
    # transpose). ---
    C2_, H2_, W2_ = 128, 8, 8
    kx2, kw2, kb2 = jax.random.split(jax.random.PRNGKey(1), 3)
    x2 = jax.random.normal(kx2, (1, C2_, H2_, W2_), dtype=jnp.float32)
    b2 = 1.0 / ((C2_ * 9) ** 0.5)
    w2 = jax.random.uniform(kw2, (C2_, C2_, 3, 3), minval=-b2, maxval=b2,
                            dtype=jnp.float32)
    bias2 = jax.random.uniform(kb2, (C2_,), minval=-b2, maxval=b2,
                               dtype=jnp.float32)
    y2 = downsample_forward(x2, w2, bias2)
    jax.block_until_ready(y2)
    y2_ref = _reference_conv(x2, w2, bias2)
    assert y2.shape == (1, C2_, H2_ // 2, W2_ // 2)
    assert jnp.allclose(y2, y2_ref, atol=1e-3, rtol=1e-3)

    print("KERNEL_OK")
</pallas_src>

<mosaic_0001>
module attributes {stable_mosaic.version = 11 : i64} {
  func.func @_conv_kernel(%arg0: i32, %arg1: i32, %arg2: memref<1x8x2x9x8xf32, #tpu.memory_space<vmem>>, %arg3: memref<1x1x1x9x8xf32, #tpu.memory_space<vmem>>, %arg4: memref<3x12x4xf32, #tpu.memory_space<vmem>>, %arg5: memref<1x4xf32, #tpu.memory_space<vmem>>, %arg6: memref<1x4x64xf32, #tpu.memory_space<vmem>>) attributes {dimension_semantics = [#tpu.dimension_semantics<parallel>, #tpu.dimension_semantics<parallel>], iteration_bounds = array<i64: 2, 1>, scalar_prefetch = 0 : i64, scratch_operands = 0 : i64, tpu.core_type = #tpu.core_type<tc>, window_params = [{transform_indices = @transform_0, window_bounds = array<i64: 1, 8, 2, 9, 8>}, {transform_indices = @transform_1, window_bounds = array<i64: 1, 1, 1, 9, 8>}, {pipeline_mode = #tpu.pipeline_mode<synchronous>, transform_indices = @transform_2, window_bounds = array<i64: 3, 12, 4>}, {pipeline_mode = #tpu.pipeline_mode<synchronous>, transform_indices = @transform_3, window_bounds = array<i64: 1, 4>}, {transform_indices = @transform_4, window_bounds = array<i64: 1, 4, 64>}]} {
    %cst = arith.constant 0.000000e+00 : f32
    %0 = vector.broadcast %cst : f32 to vector<64x4xf32>
    %c0 = arith.constant 0 : index
    %c0_0 = arith.constant 0 : index
    %c0_1 = arith.constant 0 : index
    %c0_2 = arith.constant 0 : index
    %c0_3 = arith.constant 0 : index
    %1 = vector.load %arg2[%c0, %c0_0, %c0_1, %c0_2, %c0_3] : memref<1x8x2x9x8xf32, #tpu.memory_space<vmem>>, vector<1x8x1x8x8xf32>
    %2 = vector.shape_cast %1 : vector<1x8x1x8x8xf32> to vector<8x8x8xf32>
    %c0_4 = arith.constant 0 : index
    %c0_5 = arith.constant 0 : index
    %c0_6 = arith.constant 0 : index
    %c1 = arith.constant 1 : index
    %c0_7 = arith.constant 0 : index
    %3 = vector.load %arg2[%c0_4, %c0_5, %c0_6, %c1, %c0_7] : memref<1x8x2x9x8xf32, #tpu.memory_space<vmem>>, vector<1x8x1x8x4xf32>
    %4 = vector.shape_cast %3 : vector<1x8x1x8x4xf32> to vector<8x8x4xf32>
    %5 = tpu.concatenate %2, %4 in 2 : vector<8x8x8xf32>, vector<8x8x4xf32> -> vector<8x8x12xf32>
    %6 = vector.shape_cast %5 : vector<8x8x12xf32> to vector<64x12xf32>
    %c0_8 = arith.constant 0 : index
    %c0_9 = arith.constant 0 : index
    %c0_10 = arith.constant 0 : index
    %7 = vector.load %arg4[%c0_8, %c0_9, %c0_10] : memref<3x12x4xf32, #tpu.memory_space<vmem>>, vector<1x12x4xf32>
    %8 = vector.shape_cast %7 : vector<1x12x4xf32> to vector<12x4xf32>
    %cst_11 = arith.constant dense<0.000000e+00> : vector<64x4xf32>
    %9 = tpu.matmul %6, %8, %cst_11 {dimension_numbers = #tpu.dot_dimension_numbers<[1], [0], [0], [1], [0, 0, 1, 1], [], []>} : vector<64x12xf32>, vector<12x4xf32>, vector<64x4xf32> -> vector<64x4xf32>
    %10 = arith.addf %0, %9 : vector<64x4xf32>
    %c0_12 = arith.constant 0 : index
    %c0_13 = arith.constant 0 : index
    %c1_14 = arith.constant 1 : index
    %c0_15 = arith.constant 0 : index
    %c0_16 = arith.constant 0 : index
    %11 = vector.load %arg2[%c0_12, %c0_13, %c1_14, %c0_15, %c0_16] : memref<1x8x2x9x8xf32, #tpu.memory_space<vmem>>, vector<1x8x1x8x8xf32>
    %12 = vector.shape_cast %11 : vector<1x8x1x8x8xf32> to vector<8x8x8xf32>
    %c0_17 = arith.constant 0 : index
    %c0_18 = arith.constant 0 : index
    %c1_19 = arith.constant 1 : index
    %c1_20 = arith.constant 1 : index
    %c0_21 = arith.constant 0 : index
    %13 = vector.load %arg2[%c0_17, %c0_18, %c1_19, %c1_20, %c0_21] : memref<1x8x2x9x8xf32, #tpu.memory_space<vmem>>, vector<1x8x1x8x4xf32>
    %14 = vector.shape_cast %13 : vector<1x8x1x8x4xf32> to vector<8x8x4xf32>
    %15 = tpu.concatenate %12, %14 in 2 : vector<8x8x8xf32>, vector<8x8x4xf32> -> vector<8x8x12xf32>
    %16 = vector.shape_cast %15 : vector<8x8x12xf32> to vector<64x12xf32>
    %c1_22 = arith.constant 1 : index
    %c0_23 = arith.constant 0 : index
    %c0_24 = arith.constant 0 : index
    %17 = vector.load %arg4[%c1_22, %c0_23, %c0_24] : memref<3x12x4xf32, #tpu.memory_space<vmem>>, vector<1x12x4xf32>
    %18 = vector.shape_cast %17 : vector<1x12x4xf32> to vector<12x4xf32>
    %cst_25 = arith.constant dense<0.000000e+00> : vector<64x4xf32>
    %19 = tpu.matmul %16, %18, %cst_25 {dimension_numbers = #tpu.dot_dimension_numbers<[1], [0], [0], [1], [0, 0, 1, 1], [], []>} : vector<64x12xf32>, vector<12x4xf32>, vector<64x4xf32> -> vector<64x4xf32>
    %20 = arith.addf %10, %19 : vector<64x4xf32>
    %c0_26 = arith.constant 0 : index
    %c0_27 = arith.constant 0 : index
    %c0_28 = arith.constant 0 : index
    %c0_29 = arith.constant 0 : index
    %c0_30 = arith.constant 0 : index
    %21 = vector.load %arg3[%c0_26, %c0_27, %c0_28, %c0_29, %c0_30] : memref<1x1x1x9x8xf32, #tpu.memory_space<vmem>>, vector<1x1x1x8x8xf32>
    %22 = vector.shape_cast %21 : vector<1x1x1x8x8xf32> to vector<8x8xf32>
    %23 = vector.shape_cast %22 : vector<8x8xf32> to vector<1x8x8xf32>
    %c0_31 = arith.constant 0 : index
    %c0_32 = arith.constant 0 : index
    %c0_33 = arith.constant 0 : index
    %c1_34 = arith.constant 1 : index
    %c0_35 = arith.constant 0 : index
    %24 = vector.load %arg3[%c0_31, %c0_32, %c0_33, %c1_34, %c0_35] : memref<1x1x1x9x8xf32, #tpu.memory_space<vmem>>, vector<1x1x1x8x4xf32>
    %25 = vector.shape_cast %24 : vector<1x1x1x8x4xf32> to vector<8x4xf32>
    %26 = vector.shape_cast %25 : vector<8x4xf32> to vector<1x8x4xf32>
    %27 = tpu.concatenate %23, %26 in 2 : vector<1x8x8xf32>, vector<1x8x4xf32> -> vector<1x8x12xf32>
    %28 = vector.shape_cast %27 : vector<1x8x12xf32> to vector<8x12xf32>
    %c0_36 = arith.constant 0 : index
    %c1_37 = arith.constant 1 : index
    %c0_38 = arith.constant 0 : index
    %c0_39 = arith.constant 0 : index
    %c0_40 = arith.constant 0 : index
    %29 = vector.load %arg2[%c0_36, %c1_37, %c0_38, %c0_39, %c0_40] : memref<1x8x2x9x8xf32, #tpu.memory_space<vmem>>, vector<1x7x1x8x8xf32>
    %30 = vector.shape_cast %29 : vector<1x7x1x8x8xf32> to vector<7x8x8xf32>
    %c0_41 = arith.constant 0 : index
    %c1_42 = arith.constant 1 : index
    %c0_43 = arith.constant 0 : index
    %c1_44 = arith.constant 1 : index
    %c0_45 = arith.constant 0 : index
    %31 = vector.load %arg2[%c0_41, %c1_42, %c0_43, %c1_44, %c0_45] : memref<1x8x2x9x8xf32, #tpu.memory_space<vmem>>, vector<1x7x1x8x4xf32>
    %32 = vector.shape_cast %31 : vector<1x7x1x8x4xf32> to vector<7x8x4xf32>
    %33 = tpu.concatenate %30, %32 in 2 : vector<7x8x8xf32>, vector<7x8x4xf32> -> vector<7x8x12xf32>
    %34 = vector.shape_cast %33 : vector<7x8x12xf32> to vector<56x12xf32>
    %35 = tpu.concatenate %34, %28 in 0 : vector<56x12xf32>, vector<8x12xf32> -> vector<64x12xf32>
    %c2 = arith.constant 2 : index
    %c0_46 = arith.constant 0 : index
    %c0_47 = arith.constant 0 : index
    %36 = vector.load %arg4[%c2, %c0_46, %c0_47] : memref<3x12x4xf32, #tpu.memory_space<vmem>>, vector<1x12x4xf32>
    %37 = vector.shape_cast %36 : vector<1x12x4xf32> to vector<12x4xf32>
    %cst_48 = arith.constant dense<0.000000e+00> : vector<64x4xf32>
    %38 = tpu.matmul %35, %37, %cst_48 {dimension_numbers = #tpu.dot_dimension_numbers<[1], [0], [0], [1], [0, 0, 1, 1], [], []>} : vector<64x12xf32>, vector<12x4xf32>, vector<64x4xf32> -> vector<64x4xf32>
    %39 = arith.addf %20, %38 : vector<64x4xf32>
    %c0_49 = arith.constant 0 : index
    %c0_50 = arith.constant 0 : index
    %40 = vector.load %arg5[%c0_49, %c0_50] : memref<1x4xf32, #tpu.memory_space<vmem>>, vector<1x4xf32>
    %41 = vector.broadcast %40 : vector<1x4xf32> to vector<64x4xf32>
    %42 = arith.addf %39, %41 : vector<64x4xf32>
    %43 = tpu.transpose %42, [1, 0] : vector<64x4xf32> -> vector<4x64xf32>
    %c0_51 = arith.constant 0 : index
    %c0_52 = arith.constant 0 : index
    %c0_53 = arith.constant 0 : index
    %44 = vector.load %arg6[%c0_51, %c0_52, %c0_53] : memref<1x4x64xf32, #tpu.memory_space<vmem>>, vector<1x4x64xf32>
    %45 = vector.shape_cast %44 : vector<1x4x64xf32> to vector<4x64xf32>
    %46 = vector.shape_cast %43 : vector<4x64xf32> to vector<1x4x64xf32>
    tpu.vector_store %arg6[%c0_51, %c0_52, %c0_53], %46 {strides = array<i32>} : memref<1x4x64xf32, #tpu.memory_space<vmem>>, vector<1x4x64xf32>,
    return
  }
  func.func @transform_0(%arg0: i32, %arg1: i32) -> (i32, i32, i32, i32, i32) {
    %c0_i32 = arith.constant 0 : i32
    %c0_i32_0 = arith.constant 0 : i32
    %c0_i32_1 = arith.constant 0 : i32
    %c0_i32_2 = arith.constant 0 : i32
    return %arg0, %arg1, %c0_i32, %c0_i32_0, %c0_i32_1 : i32, i32, i32, i32, i32
  }
  func.func @transform_1(%arg0: i32, %arg1: i32) -> (i32, i32, i32, i32, i32) {
    %c1_i32 = arith.constant 1 : i32
    %0 = arith.addi %arg1, %c1_i32 : i32
    %c8_i32 = arith.constant 8 : i32
    %1 = arith.muli %0, %c8_i32 : i32
    %c0_i32 = arith.constant 0 : i32
    %c0_i32_0 = arith.constant 0 : i32
    %c0_i32_1 = arith.constant 0 : i32
    %c0_i32_2 = arith.constant 0 : i32
    return %arg0, %1, %c0_i32, %c0_i32_0, %c0_i32_1 : i32, i32, i32, i32, i32
  }
  func.func @transform_2(%arg0: i32, %arg1: i32) -> (i32, i32, i32) {
    %c0_i32 = arith.constant 0 : i32
    %c0_i32_0 = arith.constant 0 : i32
    %c0_i32_1 = arith.constant 0 : i32
    %c0_i32_2 = arith.constant 0 : i32
    return %c0_i32, %c0_i32_0, %c0_i32_1 : i32, i32, i32
  }
  func.func @transform_3(%arg0: i32, %arg1: i32) -> (i32, i32) {
    %c0_i32 = arith.constant 0 : i32
    %c0_i32_0 = arith.constant 0 : i32
    %c0_i32_1 = arith.constant 0 : i32
    return %c0_i32, %c0_i32_0 : i32, i32
  }
  func.func @transform_4(%arg0: i32, %arg1: i32) -> (i32, i32, i32) {
    %c0_i32 = arith.constant 0 : i32
    %c0_i32_0 = arith.constant 0 : i32
    return %arg0, %c0_i32, %arg1 : i32, i32, i32
  }
}

</mosaic_0001>

<llo_original>
// kernel: tpu_custom_call.1
$region0: #{tpu_custom_call.1}
  #allocation0 [shape = 'u32[]', space=smem, size = 0x4, offset = 0x4, fixed_abs, tag = 'smem constant byte address 0x4 - core index']
  #allocation1 [shape = 'u32[144,128]{1,0:T(1,128)}', space=vmem, size = 0x12000, scoped, tag = 'internal scratch']
  %s0 = inlined_call_operand.vmem [shape: f32[2,9,2,9,8], index: 0, kind: input, shape index: {}]
  %s1 = inlined_call_operand.vmem [shape: f32[2,9,2,9,8], index: 1, kind: input, shape index: {}]
  %s2 = inlined_call_operand.vmem [shape: f32[3,12,4], index: 2, kind: input, shape index: {}]
  %s3 = inlined_call_operand.vmem [shape: f32[1,4], index: 3, kind: input, shape index: {}]
  %s4 = inlined_call_operand.hbm [shape: f32[2,4,64], index: 4, kind: output, shape index: {}]
  %s5 = sld [smem:[#allocation0]]
  $region49: #{tpu_custom_call.1} parent=0
    _
  %s7 = ssub.s32 1, %s5
  %s8 = scalar_select 0, %s7, %s5
  $region1: #{tpu_custom_call.1} parent=0
    #allocation2 [shape = 'u8[4096]{0}', space=vmem, size = 0x1000, scoped, tag = 'output window, operand 0']
    #allocation3 [shape = 's32[2]{0}', space=sflag, size = 0x8, scoped, tag = 'scoped memory for tpu_custom_call.1']
    %9 = vsyncpa [#allocation3], 0
    %s10 = scalar_lea.sflag [#allocation3], 1
    %11 = vsyncpa %s10, 0
    loop: start=0, step=1, limit=4
    $region2: #{tpu_custom_call.1} parent=1 // loop_pre_header
      _
    $region3: #{tpu_custom_call.1} parent=1 // loop_header
      %s13 = sphi 0, %s17
      %p14 = scmp.ge.s32.totalorder %s13, 4
      %s20 = sphi 0, %s32
      %s21 = sphi 0, %s28
      %s22 = sphi 0, %s20
      %s23 = sphi 0, %s21
      %s24 = sphi 0, %s22
      %s25 = sphi 0, %s23
      %s37 = sphi 0, %s39
      %s40 = sphi 0, %s37
      %s41 = sphi 0, %s40
      %s57 = sphi 0, %s41
      %s69 = sphi 0, %s71
      %s72 = sphi 0, %s69
      %s73 = sphi 0, %s72
      %s89 = sphi 0, %s73
      %s93 = sphi 0, %s93
      %s95 = sphi 0, %s93
      %s96 = sphi 0, %s95
      %s110 = sphi 0, %s96
      %s114 = sphi 0, %s114
      %s116 = sphi 0, %s114
      %s117 = sphi 0, %s116
      %s131 = sphi 0, %s117
      %s139 = sphi 0, %s141
      %s142 = sphi 0, %s139
      %s143 = sphi 0, %s142
      %s159 = sphi 0, %s143
    $region4: #{tpu_custom_call.1} parent=1 // loop_header_branch
      %16 = sbr.rel (%p14) target = $region8
    $region5: #{tpu_custom_call.1} parent=1 // loop_body
      %s18 = ssub.s32 %s13, 1
      %s19 = ssub.s32 %s13, 2
      %s26 = sadd.s32 1, %s21
      %p27 = scmp.ge.s32.totalorder %s26, 1
      %s28 = scalar_select %p27, 0, %s26
      %s29 = sadd.s32 1, %s20
      %s30 = scalar_select %p27, %s29, %s20
      %p31 = scmp.ge.s32.totalorder %s30, 2
      %s32 = scalar_select %p31, 0, %s30
      %s33 = ssub.s32 %s20, %s32
      %s34 = ssub.s32 %s21, %s28
      %s35 = sor.u32 %s33, %s34
      %p36 = scmp.eq.s32.totalorder %s35, 0
      %s38 = sadd.s32 %s37, 1
      %s39 = scalar_select %p36, %s37, %s38
      %p42 = pneg %p36
      %p43 = scmp.eq.s32.totalorder %s13, 1
      %p44 = por %p42, %p43
      %p45 = scmp.ne.s32.totalorder %s37, %s40
      %p46 = scmp.eq.s32.totalorder %s13, 0
      %p47 = por %p45, %p46
      %p48 = scmp.ne.s32.totalorder %s37, %s40
      %p49 = scmp.eq.s32.totalorder %s18, 1
      %p50 = por %p48, %p49
      %p51 = scmp.ne.s32.totalorder %s40, %s41
      %p52 = scmp.eq.s32.totalorder %s18, 0
      %p53 = por %p51, %p52
      %p54 = scmp.ne.s32.totalorder %s40, %s41
      %p55 = scmp.eq.s32.totalorder %s19, 1
      %p56 = por %p54, %p55
      %p58 = scmp.ne.s32.totalorder %s41, %s57
      %p59 = scmp.eq.s32.totalorder %s19, 0
      %p60 = por %p58, %p59
      %s61 = sadd.s32 %s21, 1
      %s62 = smul.u32 %s61, 8
      %s63 = sadd.s32 %s28, 1
      %s64 = smul.u32 %s63, 8
      %s65 = ssub.s32 %s20, %s32
      %s66 = ssub.s32 %s62, %s64
      %s67 = sor.u32 %s65, %s66
      %p68 = scmp.eq.s32.totalorder %s67, 0
      %s70 = sadd.s32 %s69, 1
      %s71 = scalar_select %p68, %s69, %s70
      %p74 = pneg %p68
      %p75 = scmp.eq.s32.totalorder %s13, 1
      %p76 = por %p74, %p75
      %p77 = scmp.ne.s32.totalorder %s69, %s72
      %p78 = scmp.eq.s32.totalorder %s13, 0
      %p79 = por %p77, %p78
      %p80 = scmp.ne.s32.totalorder %s69, %s72
      %p81 = scmp.eq.s32.totalorder %s18, 1
      %p82 = por %p80, %p81
      %p83 = scmp.ne.s32.totalorder %s72, %s73
      %p84 = scmp.eq.s32.totalorder %s18, 0
      %p85 = por %p83, %p84
      %p86 = scmp.ne.s32.totalorder %s72, %s73
      %p87 = scmp.eq.s32.totalorder %s19, 1
      %p88 = por %p86, %p87
      %p90 = scmp.ne.s32.totalorder %s73, %s89
      %p91 = scmp.eq.s32.totalorder %s19, 0
      %p92 = por %p90, %p91
      %s94 = sadd.s32 %s93, 1
      %p97 = scmp.eq.s32.totalorder %s13, 1
      %p98 = scmp.ne.s32.totalorder %s93, %s95
      %p99 = scmp.eq.s32.totalorder %s13, 0
      %p100 = por %p98, %p99
      %p101 = scmp.ne.s32.totalorder %s93, %s95
      %p102 = scmp.eq.s32.totalorder %s18, 1
      %p103 = por %p101, %p102
      %p104 = scmp.ne.s32.totalorder %s95, %s96
      %p105 = scmp.eq.s32.totalorder %s18, 0
      %p106 = por %p104, %p105
      %p107 = scmp.ne.s32.totalorder %s95, %s96
      %p108 = scmp.eq.s32.totalorder %s19, 1
      %p109 = por %p107, %p108
      %p111 = scmp.ne.s32.totalorder %s96, %s110
      %p112 = scmp.eq.s32.totalorder %s19, 0
      %p113 = por %p111, %p112
      %s115 = sadd.s32 %s114, 1
      %p118 = scmp.eq.s32.totalorder %s13, 1
      %p119 = scmp.ne.s32.totalorder %s114, %s116
      %p120 = scmp.eq.s32.totalorder %s13, 0
      %p121 = por %p119, %p120
      %p122 = scmp.ne.s32.totalorder %s114, %s116
      %p123 = scmp.eq.s32.totalorder %s18, 1
      %p124 = por %p122, %p123
      %p125 = scmp.ne.s32.totalorder %s116, %s117
      %p126 = scmp.eq.s32.totalorder %s18, 0
      %p127 = por %p125, %p126
      %p128 = scmp.ne.s32.totalorder %s116, %s117
      %p129 = scmp.eq.s32.totalorder %s19, 1
      %p130 = por %p128, %p129
      %p132 = scmp.ne.s32.totalorder %s117, %s131
      %p133 = scmp.eq.s32.totalorder %s19, 0
      %p134 = por %p132, %p133
      %s135 = ssub.s32 %s20, %s32
      %s136 = ssub.s32 %s21, %s28
      %s137 = sor.u32 %s135, %s136
      %p138 = scmp.eq.s32.totalorder %s137, 0
      %s140 = sadd.s32 %s139, 1
      %s141 = scalar_select %p138, %s139, %s140
      %p144 = pneg %p138
      %p145 = scmp.eq.s32.totalorder %s13, 1
      %p146 = por %p144, %p145
      %p147 = scmp.ne.s32.totalorder %s139, %s142
      %p148 = scmp.eq.s32.totalorder %s13, 0
      %p149 = por %p147, %p148
      %p150 = scmp.ne.s32.totalorder %s139, %s142
      %p151 = scmp.eq.s32.totalorder %s18, 1
      %p152 = por %p150, %p151
      %p153 = scmp.ne.s32.totalorder %s142, %s143
      %p154 = scmp.eq.s32.totalorder %s18, 0
      %p155 = por %p153, %p154
      %p156 = scmp.ne.s32.totalorder %s142, %s143
      %p157 = scmp.eq.s32.totalorder %s19, 1
      %p158 = por %p156, %p157
      %p160 = scmp.ne.s32.totalorder %s143, %s159
      %p161 = scmp.eq.s32.totalorder %s19, 0
      %p162 = por %p160, %p161
      %p163 = scmp.le.s32.totalorder 1, %s13
      %p164 = scmp.lt.s32.totalorder %s13, 3
      %p165 = pnand %p163, %p164
      %p166 = pneg %p165
      // Predicated region
      $region9: #{tpu_custom_call.1} parent=5 // pred_check
        _
      $region10: #{tpu_custom_call.1} parent=5 // pred_check_branch
        %168 = sbr.rel (%p165) target = $region12
      $region11: #{tpu_custom_call.1} parent=5 // pred_region
        %s169 = ssub.s32 %s13, 1
        // Predicated region
        $region13: #{tpu_custom_call.1} parent=11 // pred_check
          %p170 = pneg %p106
        $region14: #{tpu_custom_call.1} parent=11 // pred_check_branch
          %172 = sbr.rel (%p170) target = $region16
        $region15: #{tpu_custom_call.1} parent=11 // pred_region
          _
        $region16: #{tpu_custom_call.1} parent=11 // pred_fallthru
          _
        // Predicated region
        $region17: #{tpu_custom_call.1} parent=11 // pred_check
          %p173 = pneg %p127
        $region18: #{tpu_custom_call.1} parent=11 // pred_check_branch
          %175 = sbr.rel (%p173) target = $region20
        $region19: #{tpu_custom_call.1} parent=11 // pred_region
          _
        $region20: #{tpu_custom_call.1} parent=11 // pred_fallthru
          _
      $region12: #{tpu_custom_call.1} parent=5 // pred_fallthru
        _
      %p176 = scmp.lt.s32.totalorder %s13, 2
      // Predicated region
      $region21: #{tpu_custom_call.1} parent=5 // pred_check
        %p177 = pneg %p176
      $region22: #{tpu_custom_call.1} parent=5 // pred_check_branch
        %179 = sbr.rel (%p177) target = $region24
      $region23: #{tpu_custom_call.1} parent=5 // pred_region
        // Predicated region
        $region25: #{tpu_custom_call.1} parent=23 // pred_check
          %p180 = pneg %p47
        $region26: #{tpu_custom_call.1} parent=23 // pred_check_branch
          %182 = sbr.rel (%p180) target = $region28
        $region27: #{tpu_custom_call.1} parent=23 // pred_region
          %s183 = smul.u32 8, %s21
          %s184 = ssub.s32 9, %s183
          %p185 = scmp.lt.s32.totalorder %s184, 8
          %s186 = scalar_select %p185, %s184, 8
          %s187 = smul.u32 128, %s186
          %s188 = smul.u32 %s187, 2
          %s189 = smul.u32 %s188, 2
          %p190 = scmp.lt.s32.totalorder %s20, 1
          %s191 = scalar_select %p190, %s20, 1
          %p192 = scmp.lt.s32.totalorder %s183, 8
          %s193 = scalar_select %p192, %s183, 8
          %s194 = smul.addr %s193, 4
          %s195 = smul.addr %s191, 36
          %s196 = sadd.s32 %s194, %s195
          %s197 = smul.addr %s196, 8
          %s198 = scalar_lea.vmem %s0, %s197
          %s199 = smul.u32 8, %s21
          %s200 = ssub.s32 9, %s199
          %p201 = scmp.lt.s32.totalorder %s200, 8
          %s202 = scalar_select %p201, %s200, 8
          %s203 = smul.u32 128, %s202
          %s204 = smul.u32 %s203, 2
          %s205 = smul.u32 %s204, 2
        $region28: #{tpu_custom_call.1} parent=23 // pred_fallthru
          _
        // Predicated region
        $region29: #{tpu_custom_call.1} parent=23 // pred_check
          %p206 = pneg %p79
        $region30: #{tpu_custom_call.1} parent=23 // pred_check_branch
          %208 = sbr.rel (%p206) target = $region32
        $region31: #{tpu_custom_call.1} parent=23 // pred_region
          %s209 = sadd.s32 %s21, 1
          %s210 = smul.u32 %s209, 8
          %p211 = scmp.lt.s32.totalorder %s20, 1
          %s212 = scalar_select %p211, %s20, 1
          %p213 = scmp.lt.s32.totalorder %s210, 8
          %s214 = scalar_select %p213, %s210, 8
          %s215 = smul.addr %s214, 4
          %s216 = smul.addr %s212, 36
          %s217 = sadd.s32 %s215, %s216
          %s218 = smul.addr %s217, 8
          %s219 = scalar_lea.vmem %s1, %s218
          %s220 = sadd.s32 %s21, 1
          %s221 = smul.u32 %s220, 8
        $region32: #{tpu_custom_call.1} parent=23 // pred_fallthru
          _
      $region24: #{tpu_custom_call.1} parent=5 // pred_fallthru
        _
      %p222 = scmp.le.s32.totalorder 1, %s13
      %p223 = scmp.lt.s32.totalorder %s13, 3
      %p224 = pnand %p222, %p223
      %p225 = pneg %p224
      // Predicated region
      $region33: #{tpu_custom_call.1} parent=5 // pred_check
        _
      $region34: #{tpu_custom_call.1} parent=5 // pred_check_branch
        %227 = sbr.rel (%p224) target = $region36
      $region35: #{tpu_custom_call.1} parent=5 // pred_region
        %s228 = ssub.s32 %s13, 1
        %s229 = smul.u32 8, %s23
        %s230 = ssub.s32 9, %s229
        %p231 = scmp.lt.s32.totalorder %s230, 8
        %s232 = scalar_select %p231, %s230, 8
        %s233 = smul.u32 128, %s232
        %s234 = smul.u32 %s233, 2
        %s235 = smul.u32 %s234, 2
        %p236 = scmp.lt.s32.totalorder %s22, 1
        %s237 = scalar_select %p236, %s22, 1
        %p238 = scmp.lt.s32.totalorder %s229, 8
        %s239 = scalar_select %p238, %s229, 8
        %s240 = smul.addr %s239, 4
        %s241 = smul.addr %s237, 36
        %s242 = sadd.s32 %s240, %s241
        %s243 = smul.addr %s242, 8
        %s244 = scalar_lea.vmem %s0, %s243
        %p245 = pneg %p53
        %p246 = pneg %p50
        %s247 = sadd.s32 %s23, 1
        %s248 = smul.u32 %s247, 8
        %p249 = scmp.lt.s32.totalorder %s22, 1
        %s250 = scalar_select %p249, %s22, 1
        %p251 = scmp.lt.s32.totalorder %s248, 8
        %s252 = scalar_select %p251, %s248, 8
        %s253 = smul.addr %s252, 4
        %s254 = smul.addr %s250, 36
        %s255 = sadd.s32 %s253, %s254
        %s256 = smul.addr %s255, 8
        %s257 = scalar_lea.vmem %s1, %s256
        %p258 = pneg %p85
        %p259 = pneg %p82
        %p260 = pneg %p106
        %p261 = pneg %p103
        %p262 = pneg %p127
        %p263 = pneg %p124
        %p264 = pneg %p155
        %p265 = pneg %p152
        %s266 = sand.u32 %s142, 1
        %s267 = scalar_lea.sflag [#allocation3], %s266
        %s268 = sand.u32 %s142, 1
        %s269 = smul.addr %s268, 4
        %s270 = scalar_lea.vmem [#allocation2], %s269
        %s271 = smul.u32 8, %s23
        %s272 = ssub.s32 9, %s271
        %p273 = scmp.lt.s32.totalorder %s272, 8
        %s274 = scalar_select %p273, %s272, 8
        %s275 = smul.u32 128, %s274
        %s276 = smul.u32 %s275, 2
        %s277 = smul.u32 %s276, 2
        %p278 = scmp.lt.s32.totalorder %s22, 1
        %s279 = scalar_select %p278, %s22, 1
        %p280 = scmp.lt.s32.totalorder %s271, 8
        %s281 = scalar_select %p280, %s271, 8
        %s282 = smul.addr %s281, 4
        %s283 = smul.addr %s279, 36
        %s284 = sadd.s32 %s282, %s283
        %s285 = smul.addr %s284, 8
        %s286 = scalar_lea.vmem %s0, %s285
        %s287 = smul.u32 8, %s23
        %s288 = ssub.s32 9, %s287
        %p289 = scmp.lt.s32.totalorder %s288, 8
        %s290 = scalar_select %p289, %s288, 8
        %s291 = smul.u32 128, %s290
        %s292 = smul.u32 %s291, 2
        %s293 = smul.u32 %s292, 2
        %s294 = sadd.s32 %s23, 1
        %s295 = smul.u32 %s294, 8
        %p296 = scmp.lt.s32.totalorder %s22, 1
        %s297 = scalar_select %p296, %s22, 1
        %p298 = scmp.lt.s32.totalorder %s295, 8
        %s299 = scalar_select %p298, %s295, 8
        %s300 = smul.addr %s299, 4
        %s301 = smul.addr %s297, 36
        %s302 = sadd.s32 %s300, %s301
        %s303 = smul.addr %s302, 8
        %s304 = scalar_lea.vmem %s1, %s303
        %s305 = sadd.s32 %s23, 1
        %s306 = smul.u32 %s305, 8
        %v307 = vld [vmem:[%s286] sm:$0xff]
        %v308 = vld [vmem:[%s286 + $0x20] sm:$0xff]
        %v309 = vld [vmem:[%s286 + $0x40] sm:$0xff]
        %v310 = vld [vmem:[%s286 + $0x60] sm:$0xff]
        %v311 = vld [vmem:[%s286 + $0x80] sm:$0xff]
        %v312 = vld [vmem:[%s286 + $0xa0] sm:$0xff]
        %v313 = vld [vmem:[%s286 + $0xc0] sm:$0xff]
        %v314 = vld [vmem:[%s286 + $0xe0] sm:$0xff]
        %v315 = vld [vmem:[%s286 + $0x1] sm:$0xff]
        %v316 = vld [vmem:[%s286 + $0x21] sm:$0xff]
        %v317 = vld [vmem:[%s286 + $0x41] sm:$0xff]
        %v318 = vld [vmem:[%s286 + $0x61] sm:$0xff]
        %v319 = vld [vmem:[%s286 + $0x81] sm:$0xff]
        %v320 = vld [vmem:[%s286 + $0xa1] sm:$0xff]
        %v321 = vld [vmem:[%s286 + $0xc1] sm:$0xff]
        %v322 = vld [vmem:[%s286 + $0xe1] sm:$0xff]
        %331 = vrot.lane.b32.xlu0 %v315, 8
        %v332 = vpop.permute.xlu0 %331
        %333 = vrot.lane.b32.xlu0 %v316, 8
        %v334 = vpop.permute.xlu0 %333
        %335 = vrot.lane.b32.xlu0 %v317, 8
        %v336 = vpop.permute.xlu0 %335
        %337 = vrot.lane.b32.xlu0 %v318, 8
        %v338 = vpop.permute.xlu0 %337
        %339 = vrot.lane.b32.xlu0 %v319, 8
        %v340 = vpop.permute.xlu0 %339
        %341 = vrot.lane.b32.xlu0 %v320, 8
        %v342 = vpop.permute.xlu0 %341
        %343 = vrot.lane.b32.xlu0 %v321, 8
        %v344 = vpop.permute.xlu0 %343
        %345 = vrot.lane.b32.xlu0 %v322, 8
        %v346 = vpop.permute.xlu0 %345
        %vm355 = vcmask 64512
        %v356 = vsel %vm355, %v307, %v332
        %v357 = vsel %vm355, %v308, %v334
        %v358 = vsel %vm355, %v309, %v336
        %v359 = vsel %vm355, %v310, %v338
        %v360 = vsel %vm355, %v311, %v340
        %v361 = vsel %vm355, %v312, %v342
        %v362 = vsel %vm355, %v313, %v344
        %v363 = vsel %vm355, %v314, %v346
        %v364 = vld [vmem:[%s2] sm:$0xff]
        %v365 = vld [vmem:[%s2 + $0x8] sm:$0xf]
        %s366 = scalar_lea.vmem %s286, 16
        %v367 = vld [vmem:[%s366] sm:$0xff]
        %v368 = vld [vmem:[%s366 + $0x20] sm:$0xff]
        %v369 = vld [vmem:[%s366 + $0x40] sm:$0xff]
        %v370 = vld [vmem:[%s366 + $0x60] sm:$0xff]
        %v371 = vld [vmem:[%s366 + $0x80] sm:$0xff]
        %v372 = vld [vmem:[%s366 + $0xa0] sm:$0xff]
        %v373 = vld [vmem:[%s366 + $0xc0] sm:$0xff]
        %v374 = vld [vmem:[%s366 + $0xe0] sm:$0xff]
        %v375 = vld [vmem:[%s366 + $0x1] sm:$0xff]
        %v376 = vld [vmem:[%s366 + $0x21] sm:$0xff]
        %v377 = vld [vmem:[%s366 + $0x41] sm:$0xff]
        %v378 = vld [vmem:[%s366 + $0x61] sm:$0xff]
        %v379 = vld [vmem:[%s366 + $0x81] sm:$0xff]
        %v380 = vld [vmem:[%s366 + $0xa1] sm:$0xff]
        %v381 = vld [vmem:[%s366 + $0xc1] sm:$0xff]
        %v382 = vld [vmem:[%s366 + $0xe1] sm:$0xff]
        %391 = vrot.lane.b32.xlu0 %v375, 8
        %v392 = vpop.permute.xlu0 %391
        %393 = vrot.lane.b32.xlu0 %v376, 8
        %v394 = vpop.permute.xlu0 %393
        %395 = vrot.lane.b32.xlu0 %v377, 8
        %v396 = vpop.permute.xlu0 %395
        %397 = vrot.lane.b32.xlu0 %v378, 8
        %v398 = vpop.permute.xlu0 %397
        %399 = vrot.lane.b32.xlu0 %v379, 8
        %v400 = vpop.permute.xlu0 %399
        %401 = vrot.lane.b32.xlu0 %v380, 8
        %v402 = vpop.permute.xlu0 %401
        %403 = vrot.lane.b32.xlu0 %v381, 8
        %v404 = vpop.permute.xlu0 %403
        %405 = vrot.lane.b32.xlu0 %v382, 8
        %v406 = vpop.permute.xlu0 %405
        %v415 = vsel %vm355, %v367, %v392
        %v416 = vsel %vm355, %v368, %v394
        %v417 = vsel %vm355, %v369, %v396
        %v418 = vsel %vm355, %v370, %v398
        %v419 = vsel %vm355, %v371, %v400
        %v420 = vsel %vm355, %v372, %v402
        %v421 = vsel %vm355, %v373, %v404
        %v422 = vsel %vm355, %v374, %v406
        %s423 = scalar_lea.vmem %s2, 16
        %v424 = vld [vmem:[%s423] sm:$0xff]
        %v425 = vld [vmem:[%s423 + $0x8] sm:$0xf]
        %vm426 = vcmask 97280
        %v428 = vsel %vm426, %v415, 0
        %v431 = vsel %vm426, %v416, 0
        %v434 = vsel %vm426, %v417, 0
        %v437 = vsel %vm426, %v418, 0
        %v440 = vsel %vm426, %v419, 0
        %v443 = vsel %vm426, %v420, 0
        %v446 = vsel %vm426, %v421, 0
        %v449 = vsel %vm426, %v422, 0
        %vm451 = vcmask 1043456
        %v453 = vsel %vm451, %v425, 0
        %455 = vmatprep.subr.mxu0 0.0
        %456 = vmatpush1.msra.mxu0 0.0
        %457 = vmatprep.subr.mxu0 0.0
        %458 = vmatpush1.msra.mxu0 0.0
        %459 = vmatprep.subr.mxu0 0.0
        %460 = vmatpush1.msra.mxu0 0.0
        %461 = vmatprep.subr.mxu0 0.0
        %462 = vmatpush1.msra.mxu0 0.0
        %463 = vmatprep.subr.mxu0 0.0
        %464 = vmatpush1.msra.mxu0 0.0
        %465 = vmatprep.subr.mxu0 0.0
        %466 = vmatpush1.msra.mxu0 0.0
        %467 = vmatprep.subr.mxu0 0.0
        %468 = vmatpush1.msra.mxu0 0.0
        %469 = vmatprep.subr.mxu0 0.0
        %470 = vmatpush1.msra.mxu0 0.0
        %471 = vmatprep.subr.mxu0 0.0
        %472 = vmatpush1.msra.mxu0 0.0
        %473 = vmatprep.subr.mxu0 0.0
        %474 = vmatpush1.msra.mxu0 0.0
        %475 = vmatprep.subr.mxu0 0.0
        %476 = vmatpush1.msra.mxu0 0.0
        %477 = vmatprep.subr.mxu0 0.0
        %478 = vmatpush1.msra.mxu0 0.0
        %479 = vmatprep.subr.mxu0 0.0
        %480 = vmatpush1.msra.mxu0 0.0
        %481 = vmatprep.subr.mxu0 0.0
        %482 = vmatpush1.msra.mxu0 0.0
        %483 = vmatprep.subr.mxu0 0.0
        %484 = vmatpush1.msra.mxu0 %v453
        %485 = vmatprep.subr.mxu0 0.0
        %486 = vmatpush1.msra.mxu0 %v424
        %487 = vmatprep.subr.mxu0 0.0
        %488 = vmatpush2.msra.mxu0 0.0
        %489 = vmatprep.subr.mxu0 0.0
        %490 = vmatpush2.msra.mxu0 0.0
        %491 = vmatprep.subr.mxu0 0.0
        %492 = vmatpush2.msra.mxu0 0.0
        %493 = vmatprep.subr.mxu0 0.0
        %494 = vmatpush2.msra.mxu0 0.0
        %495 = vmatprep.subr.mxu0 0.0
        %496 = vmatpush2.msra.mxu0 0.0
        %497 = vmatprep.subr.mxu0 0.0
        %498 = vmatpush2.msra.mxu0 0.0
        %499 = vmatprep.subr.mxu0 0.0
        %500 = vmatpush2.msra.mxu0 0.0
        %501 = vmatprep.subr.mxu0 0.0
        %502 = vmatpush2.msra.mxu0 0.0
        %503 = vmatprep.subr.mxu0 0.0
        %504 = vmatpush2.msra.mxu0 0.0
        %505 = vmatprep.subr.mxu0 0.0
        %506 = vmatpush2.msra.mxu0 0.0
        %507 = vmatprep.subr.mxu0 0.0
        %508 = vmatpush2.msra.mxu0 0.0
        %509 = vmatprep.subr.mxu0 0.0
        %510 = vmatpush2.msra.mxu0 0.0
        %511 = vmatprep.subr.mxu0 0.0
        %512 = vmatpush2.msra.mxu0 0.0
        %513 = vmatprep.subr.mxu0 0.0
        %514 = vmatpush2.msra.mxu0 0.0
        %515 = vmatprep.subr.mxu0 0.0
        %516 = vmatpush2.msra.mxu0 0.0
        %517 = vmatprep.subr.mxu0 0.0
        %518 = vmatpush2.msra.mxu0 0.0
        %519 = vmatprep.mubr.f32.mxu0 0.0
        %520 = vmatmul.mubr.f32.gmra.mxu0 %v428
        %v521 = vpop.f32.mrf.mxu0
        %v522 = vadd.f32 0.0, %v521
        %v523 = vpop.f32.mrf.mxu0
        %524 = vmatprep.mubr.f32.mxu0 0.0
        %525 = vmatmul.mubr.f32.gmra.mxu0 %v431
        %v526 = vpop.f32.mrf.mxu0
        %v527 = vadd.f32 0.0, %v526
        %v528 = vpop.f32.mrf.mxu0
        %529 = vmatprep.mubr.f32.mxu0 0.0
        %530 = vmatmul.mubr.f32.gmra.mxu0 %v434
        %v531 = vpop.f32.mrf.mxu0
        %v532 = vadd.f32 0.0, %v531
        %v533 = vpop.f32.mrf.mxu0
        %534 = vmatprep.mubr.f32.mxu0 0.0
        %535 = vmatmul.mubr.f32.gmra.mxu0 %v437
        %v536 = vpop.f32.mrf.mxu0
        %v537 = vadd.f32 0.0, %v536
        %v538 = vpop.f32.mrf.mxu0
        %539 = vmatprep.mubr.f32.mxu0 0.0
        %540 = vmatmul.mubr.f32.gmra.mxu0 %v440
        %v541 = vpop.f32.mrf.mxu0
        %v542 = vadd.f32 0.0, %v541
        %v543 = vpop.f32.mrf.mxu0
        %544 = vmatprep.mubr.f32.mxu0 0.0
        %545 = vmatmul.mubr.f32.gmra.mxu0 %v443
        %v546 = vpop.f32.mrf.mxu0
        %v547 = vadd.f32 0.0, %v546
        %v548 = vpop.f32.mrf.mxu0
        %549 = vmatprep.mubr.f32.mxu0 0.0
        %550 = vmatmul.mubr.f32.gmra.mxu0 %v446
        %v551 = vpop.f32.mrf.mxu0
        %v552 = vadd.f32 0.0, %v551
        %v553 = vpop.f32.mrf.mxu0
        %554 = vmatprep.mubr.f32.mxu0 0.0
        %555 = vmatmul.mubr.f32.gmra.mxu0 %v449
        %v556 = vpop.f32.mrf.mxu0
        %v557 = vadd.f32 0.0, %v556
        %v558 = vpop.f32.mrf.mxu0
        %559 = vdwg.mxu0
        %v561 = vsel %vm426, %v356, 0
        %v564 = vsel %vm426, %v357, 0
        %v567 = vsel %vm426, %v358, 0
        %v570 = vsel %vm426, %v359, 0
        %v573 = vsel %vm426, %v360, 0
        %v576 = vsel %vm426, %v361, 0
        %v579 = vsel %vm426, %v362, 0
        %v582 = vsel %vm426, %v363, 0
        %v585 = vsel %vm451, %v365, 0
        %587 = vmatprep.subr.mxu0 0.0
        %588 = vmatpush1.msra.mxu0 0.0
        %589 = vmatprep.subr.mxu0 0.0
        %590 = vmatpush1.msra.mxu0 0.0
        %591 = vmatprep.subr.mxu0 0.0
        %592 = vmatpush1.msra.mxu0 0.0
        %593 = vmatprep.subr.mxu0 0.0
        %594 = vmatpush1.msra.mxu0 0.0
        %595 = vmatprep.subr.mxu0 0.0
        %596 = vmatpush1.msra.mxu0 0.0
        %597 = vmatprep.subr.mxu0 0.0
        %598 = vmatpush1.msra.mxu0 0.0
        %599 = vmatprep.subr.mxu0 0.0
        %600 = vmatpush1.msra.mxu0 0.0
        %601 = vmatprep.subr.mxu0 0.0
        %602 = vmatpush1.msra.mxu0 0.0
        %603 = vmatprep.subr.mxu0 0.0
        %604 = vmatpush1.msra.mxu0 0.0
        %605 = vmatprep.subr.mxu0 0.0
        %606 = vmatpush1.msra.mxu0 0.0
        %607 = vmatprep.subr.mxu0 0.0
        %608 = vmatpush1.msra.mxu0 0.0
        %609 = vmatprep.subr.mxu0 0.0
        %610 = vmatpush1.msra.mxu0 0.0
        %611 = vmatprep.subr.mxu0 0.0
        %612 = vmatpush1.msra.mxu0 0.0
        %613 = vmatprep.subr.mxu0 0.0
        %614 = vmatpush1.msra.mxu0 0.0
        %615 = vmatprep.subr.mxu0 0.0
        %616 = vmatpush1.msra.mxu0 %v585
        %617 = vmatprep.subr.mxu0 0.0
        %618 = vmatpush1.msra.mxu0 %v364
        %619 = vmatprep.subr.mxu0 0.0
        %620 = vmatpush2.msra.mxu0 0.0
        %621 = vmatprep.subr.mxu0 0.0
        %622 = vmatpush2.msra.mxu0 0.0
        %623 = vmatprep.subr.mxu0 0.0
        %624 = vmatpush2.msra.mxu0 0.0
        %625 = vmatprep.subr.mxu0 0.0
        %626 = vmatpush2.msra.mxu0 0.0
        %627 = vmatprep.subr.mxu0 0.0
        %628 = vmatpush2.msra.mxu0 0.0
        %629 = vmatprep.subr.mxu0 0.0
        %630 = vmatpush2.msra.mxu0 0.0
        %631 = vmatprep.subr.mxu0 0.0
        %632 = vmatpush2.msra.mxu0 0.0
        %633 = vmatprep.subr.mxu0 0.0
        %634 = vmatpush2.msra.mxu0 0.0
        %635 = vmatprep.subr.mxu0 0.0
        %636 = vmatpush2.msra.mxu0 0.0
        %637 = vmatprep.subr.mxu0 0.0
        %638 = vmatpush2.msra.mxu0 0.0
        %639 = vmatprep.subr.mxu0 0.0
        %640 = vmatpush2.msra.mxu0 0.0
        %641 = vmatprep.subr.mxu0 0.0
        %642 = vmatpush2.msra.mxu0 0.0
        %643 = vmatprep.subr.mxu0 0.0
        %644 = vmatpush2.msra.mxu0 0.0
        %645 = vmatprep.subr.mxu0 0.0
        %646 = vmatpush2.msra.mxu0 0.0
        %647 = vmatprep.subr.mxu0 0.0
        %648 = vmatpush2.msra.mxu0 0.0
        %649 = vmatprep.subr.mxu0 0.0
        %650 = vmatpush2.msra.mxu0 0.0
        %651 = vmatprep.mubr.f32.mxu0 0.0
        %652 = vmatmul.mubr.f32.gmra.mxu0 %v561
        %v653 = vpop.f32.mrf.mxu0
        %v654 = vadd.f32 %v522, %v653
        %v655 = vpop.f32.mrf.mxu0
        %656 = vmatprep.mubr.f32.mxu0 0.0
        %657 = vmatmul.mubr.f32.gmra.mxu0 %v564
        %v658 = vpop.f32.mrf.mxu0
        %v659 = vadd.f32 %v527, %v658
        %v660 = vpop.f32.mrf.mxu0
        %661 = vmatprep.mubr.f32.mxu0 0.0
        %662 = vmatmul.mubr.f32.gmra.mxu0 %v567
        %v663 = vpop.f32.mrf.mxu0
        %v664 = vadd.f32 %v532, %v663
        %v665 = vpop.f32.mrf.mxu0
        %666 = vmatprep.mubr.f32.mxu0 0.0
        %667 = vmatmul.mubr.f32.gmra.mxu0 %v570
        %v668 = vpop.f32.mrf.mxu0
        %v669 = vadd.f32 %v537, %v668
        %v670 = vpop.f32.mrf.mxu0
        %671 = vmatprep.mubr.f32.mxu0 0.0
        %672 = vmatmul.mubr.f32.gmra.mxu0 %v573
        %v673 = vpop.f32.mrf.mxu0
        %v674 = vadd.f32 %v542, %v673
        %v675 = vpop.f32.mrf.mxu0
        %676 = vmatprep.mubr.f32.mxu0 0.0
        %677 = vmatmul.mubr.f32.gmra.mxu0 %v576
        %v678 = vpop.f32.mrf.mxu0
        %v679 = vadd.f32 %v547, %v678
        %v680 = vpop.f32.mrf.mxu0
        %681 = vmatprep.mubr.f32.mxu0 0.0
        %682 = vmatmul.mubr.f32.gmra.mxu0 %v579
        %v683 = vpop.f32.mrf.mxu0
        %v684 = vadd.f32 %v552, %v683
        %v685 = vpop.f32.mrf.mxu0
        %686 = vmatprep.mubr.f32.mxu0 0.0
        %687 = vmatmul.mubr.f32.gmra.mxu0 %v582
        %v688 = vpop.f32.mrf.mxu0
        %v689 = vadd.f32 %v557, %v688
        %v690 = vpop.f32.mrf.mxu0
        %691 = vdwg.mxu0
        %v692 = vld [vmem:[%s304] sm:$0xff]
        %v693 = vld [vmem:[%s304 + $0x1] sm:$0xff]
        %695 = vrot.lane.b32.xlu0 %v693, 8
        %v696 = vpop.permute.xlu0 %695
        %v698 = vsel %vm355, %v692, %v696
        %s699 = scalar_lea.vmem %s286, 32
        %v700 = vld [vmem:[%s699] sm:$0xff]
        %v701 = vld [vmem:[%s699 + $0x20] sm:$0xff]
        %v702 = vld [vmem:[%s699 + $0x40] sm:$0xff]
        %v703 = vld [vmem:[%s699 + $0x60] sm:$0xff]
        %v704 = vld [vmem:[%s699 + $0x80] sm:$0xff]
        %v705 = vld [vmem:[%s699 + $0xa0] sm:$0xff]
        %v706 = vld [vmem:[%s699 + $0xc0] sm:$0xff]
        %v707 = vld [vmem:[%s699 + $0x1] sm:$0xff]
        %v708 = vld [vmem:[%s699 + $0x21] sm:$0xff]
        %v709 = vld [vmem:[%s699 + $0x41] sm:$0xff]
        %v710 = vld [vmem:[%s699 + $0x61] sm:$0xff]
        %v711 = vld [vmem:[%s699 + $0x81] sm:$0xff]
        %v712 = vld [vmem:[%s699 + $0xa1] sm:$0xff]
        %v713 = vld [vmem:[%s699 + $0xc1] sm:$0xff]
        %721 = vrot.lane.b32.xlu0 %v707, 8
        %v722 = vpop.permute.xlu0 %721
        %723 = vrot.lane.b32.xlu0 %v708, 8
        %v724 = vpop.permute.xlu0 %723
        %725 = vrot.lane.b32.xlu0 %v709, 8
        %v726 = vpop.permute.xlu0 %725
        %727 = vrot.lane.b32.xlu0 %v710, 8
        %v728 = vpop.permute.xlu0 %727
        %729 = vrot.lane.b32.xlu0 %v711, 8
        %v730 = vpop.permute.xlu0 %729
        %731 = vrot.lane.b32.xlu0 %v712, 8
        %v732 = vpop.permute.xlu0 %731
        %733 = vrot.lane.b32.xlu0 %v713, 8
        %v734 = vpop.permute.xlu0 %733
        %v742 = vsel %vm355, %v700, %v722
        %v743 = vsel %vm355, %v701, %v724
        %v744 = vsel %vm355, %v702, %v726
        %v745 = vsel %vm355, %v703, %v728
        %v746 = vsel %vm355, %v704, %v730
        %v747 = vsel %vm355, %v705, %v732
        %v748 = vsel %vm355, %v706, %v734
        %s749 = scalar_lea.vmem %s2, 32
        %v750 = vld [vmem:[%s749] sm:$0xff]
        %v751 = vld [vmem:[%s749 + $0x8] sm:$0xf]
        %v753 = vsel %vm426, %v742, 0
        %v756 = vsel %vm426, %v743, 0
        %v759 = vsel %vm426, %v744, 0
        %v762 = vsel %vm426, %v745, 0
        %v765 = vsel %vm426, %v746, 0
        %v768 = vsel %vm426, %v747, 0
        %v771 = vsel %vm426, %v748, 0
        %v774 = vsel %vm426, %v698, 0
        %v777 = vsel %vm451, %v751, 0
        %779 = vmatprep.subr.mxu0 0.0
        %780 = vmatpush1.msra.mxu0 0.0
        %781 = vmatprep.subr.mxu0 0.0
        %782 = vmatpush1.msra.mxu0 0.0
        %783 = vmatprep.subr.mxu0 0.0
        %784 = vmatpush1.msra.mxu0 0.0
        %785 = vmatprep.subr.mxu0 0.0
        %786 = vmatpush1.msra.mxu0 0.0
        %787 = vmatprep.subr.mxu0 0.0
        %788 = vmatpush1.msra.mxu0 0.0
        %789 = vmatprep.subr.mxu0 0.0
        %790 = vmatpush1.msra.mxu0 0.0
        %791 = vmatprep.subr.mxu0 0.0
        %792 = vmatpush1.msra.mxu0 0.0
        %793 = vmatprep.subr.mxu0 0.0
        %794 = vmatpush1.msra.mxu0 0.0
        %795 = vmatprep.subr.mxu0 0.0
        %796 = vmatpush1.msra.mxu0 0.0
        %797 = vmatprep.subr.mxu0 0.0
        %798 = vmatpush1.msra.mxu0 0.0
        %799 = vmatprep.subr.mxu0 0.0
        %800 = vmatpush1.msra.mxu0 0.0
        %801 = vmatprep.subr.mxu0 0.0
        %802 = vmatpush1.msra.mxu0 0.0
        %803 = vmatprep.subr.mxu0 0.0
        %804 = vmatpush1.msra.mxu0 0.0
        %805 = vmatprep.subr.mxu0 0.0
        %806 = vmatpush1.msra.mxu0 0.0
        %807 = vmatprep.subr.mxu0 0.0
        %808 = vmatpush1.msra.mxu0 %v777
        %809 = vmatprep.subr.mxu0 0.0
        %810 = vmatpush1.msra.mxu0 %v750
        %811 = vmatprep.subr.mxu0 0.0
        %812 = vmatpush2.msra.mxu0 0.0
        %813 = vmatprep.subr.mxu0 0.0
        %814 = vmatpush2.msra.mxu0 0.0
        %815 = vmatprep.subr.mxu0 0.0
        %816 = vmatpush2.msra.mxu0 0.0
        %817 = vmatprep.subr.mxu0 0.0
        %818 = vmatpush2.msra.mxu0 0.0
        %819 = vmatprep.subr.mxu0 0.0
        %820 = vmatpush2.msra.mxu0 0.0
        %821 = vmatprep.subr.mxu0 0.0
        %822 = vmatpush2.msra.mxu0 0.0
        %823 = vmatprep.subr.mxu0 0.0
        %824 = vmatpush2.msra.mxu0 0.0
        %825 = vmatprep.subr.mxu0 0.0
        %826 = vmatpush2.msra.mxu0 0.0
        %827 = vmatprep.subr.mxu0 0.0
        %828 = vmatpush2.msra.mxu0 0.0
        %829 = vmatprep.subr.mxu0 0.0
        %830 = vmatpush2.msra.mxu0 0.0
        %831 = vmatprep.subr.mxu0 0.0
        %832 = vmatpush2.msra.mxu0 0.0
        %833 = vmatprep.subr.mxu0 0.0
        %834 = vmatpush2.msra.mxu0 0.0
        %835 = vmatprep.subr.mxu0 0.0
        %836 = vmatpush2.msra.mxu0 0.0
        %837 = vmatprep.subr.mxu0 0.0
        %838 = vmatpush2.msra.mxu0 0.0
        %839 = vmatprep.subr.mxu0 0.0
        %840 = vmatpush2.msra.mxu0 0.0
        %841 = vmatprep.subr.mxu0 0.0
        %842 = vmatpush2.msra.mxu0 0.0
        %843 = vmatprep.mubr.f32.mxu0 0.0
        %844 = vmatmul.mubr.f32.gmra.mxu0 %v753
        %v845 = vpop.f32.mrf.mxu0
        %v846 = vadd.f32 0.0, %v845
        %v847 = vpop.f32.mrf.mxu0
        %848 = vmatprep.mubr.f32.mxu0 0.0
        %849 = vmatmul.mubr.f32.gmra.mxu0 %v756
        %v850 = vpop.f32.mrf.mxu0
        %v851 = vadd.f32 0.0, %v850
        %v852 = vpop.f32.mrf.mxu0
        %853 = vmatprep.mubr.f32.mxu0 0.0
        %854 = vmatmul.mubr.f32.gmra.mxu0 %v759
        %v855 = vpop.f32.mrf.mxu0
        %v856 = vadd.f32 0.0, %v855
        %v857 = vpop.f32.mrf.mxu0
        %858 = vmatprep.mubr.f32.mxu0 0.0
        %859 = vmatmul.mubr.f32.gmra.mxu0 %v762
        %v860 = vpop.f32.mrf.mxu0
        %v861 = vadd.f32 0.0, %v860
        %v862 = vpop.f32.mrf.mxu0
        %863 = vmatprep.mubr.f32.mxu0 0.0
        %864 = vmatmul.mubr.f32.gmra.mxu0 %v765
        %v865 = vpop.f32.mrf.mxu0
        %v866 = vadd.f32 0.0, %v865
        %v867 = vpop.f32.mrf.mxu0
        %868 = vmatprep.mubr.f32.mxu0 0.0
        %869 = vmatmul.mubr.f32.gmra.mxu0 %v768
        %v870 = vpop.f32.mrf.mxu0
        %v871 = vadd.f32 0.0, %v870
        %v872 = vpop.f32.mrf.mxu0
        %873 = vmatprep.mubr.f32.mxu0 0.0
        %874 = vmatmul.mubr.f32.gmra.mxu0 %v771
        %v875 = vpop.f32.mrf.mxu0
        %v876 = vadd.f32 0.0, %v875
        %v877 = vpop.f32.mrf.mxu0
        %878 = vmatprep.mubr.f32.mxu0 0.0
        %879 = vmatmul.mubr.f32.gmra.mxu0 %v774
        %v880 = vpop.f32.mrf.mxu0
        %v881 = vadd.f32 0.0, %v880
        %v882 = vpop.f32.mrf.mxu0
        %883 = vdwg.mxu0
        %v884 = vadd.f32 %v654, %v846
        %v885 = vadd.f32 %v659, %v851
        %v886 = vadd.f32 %v664, %v856
        %v887 = vadd.f32 %v669, %v861
        %v888 = vadd.f32 %v674, %v866
        %v889 = vadd.f32 %v679, %v871
        %v890 = vadd.f32 %v684, %v876
        %v891 = vadd.f32 %v689, %v881
        %v892 = vld [vmem:[%s3] sm:$0x1]
        %v894 = vlaneseq
        %v895 = vshrl.u32 %v894, 7
        %v896 = vsub.s32 0, %v895
        %v897 = vrot.slane %v892, %v896
        %v899 = vadd.f32 %v884, %v897
        %v900 = vadd.f32 %v885, %v897
        %v901 = vadd.f32 %v886, %v897
        %v902 = vadd.f32 %v887, %v897
        %v903 = vadd.f32 %v888, %v897
        %v904 = vadd.f32 %v889, %v897
        %v905 = vadd.f32 %v890, %v897
        %v906 = vadd.f32 %v891, %v897
        %907 = vxpose.xlu0.b32.start [1/16] %v899, 128
        %908 = vxpose.xlu0.b32.cont [2/16] %v900, 128
        %909 = vxpose.xlu0.b32.cont [3/16] %v901, 128
        %910 = vxpose.xlu0.b32.cont [4/16] %v902, 128
        %911 = vxpose.xlu0.b32.cont [5/16] %v903, 128
        %912 = vxpose.xlu0.b32.cont [6/16] %v904, 128
        %913 = vxpose.xlu0.b32.cont [7/16] %v905, 128
        %914 = vxpose.xlu0.b32.cont [8/16] %v906, 128
        %915 = vxpose.xlu0.b32.cont [9/16] 0.0, 128
        %916 = vxpose.xlu0.b32.cont [10/16] 0.0, 128
        %917 = vxpose.xlu0.b32.cont [11/16] 0.0, 128
        %918 = vxpose.xlu0.b32.cont [12/16] 0.0, 128
        %919 = vxpose.xlu0.b32.cont [13/16] 0.0, 128
        %920 = vxpose.xlu0.b32.cont [14/16] 0.0, 128
        %921 = vxpose.xlu0.b32.cont [15/16] 0.0, 128
        %922 = vxpose.xlu0.b32.end [16/16] 0.0, 128
        %v923 = vpop.trf.xlu0
        %v924 = vpop.trf.xlu0
        %v925 = vpop.trf.xlu0
        %v926 = vpop.trf.xlu0
        %v927 = vpop.trf.xlu0
        %v928 = vpop.trf.xlu0
        %v929 = vpop.trf.xlu0
        %v930 = vpop.trf.xlu0
        %v931 = vpop.trf.xlu0
        %v932 = vpop.trf.xlu0
        %v933 = vpop.trf.xlu0
        %v934 = vpop.trf.xlu0
        %v935 = vpop.trf.xlu0
        %v936 = vpop.trf.xlu0
        %v937 = vpop.trf.xlu0
        %v938 = vpop.trf.xlu0
        %vm939 = vcmask 519168
        %940 = vst.msk [vmem:[%s270] sm:$0xf] %vm939, %v923
        %s941 = sand.u32 %s142, 1
        %s942 = scalar_lea.sflag [#allocation3], %s941
        %s943 = sand.u32 %s142, 1
        %s944 = smul.addr %s943, 4
        %s945 = scalar_lea.vmem [#allocation2], %s944
        // Predicated region
        $region37: #{tpu_custom_call.1} parent=35 // pred_check
          %p946 = pneg %p152
        $region38: #{tpu_custom_call.1} parent=35 // pred_check_branch
          %948 = sbr.rel (%p946) target = $region40
        $region39: #{tpu_custom_call.1} parent=35 // pred_region
          %s950 = ssub.s32 64, 64
          %951 = vsyncadd %s942, %s950
          %s952 = sadd.s32 %s23, %s22
          %s953 = smul.addr %s952, 64
          %s954 = scalar_lea.hbm %s4, %s953
          %s956 = sshll.u32 %s945, 4
          %s957 = int_to_ptr.vmem [resolvable:$true] %s956
          %959 = dma.vmem_to_hbm [thread:$0]  %s957, 64, %s954, %s942
        $region40: #{tpu_custom_call.1} parent=35 // pred_fallthru
          _
      $region36: #{tpu_custom_call.1} parent=5 // pred_fallthru
        _
      %p960 = scmp.le.s32.totalorder 2, %s13
      // Predicated region
      $region41: #{tpu_custom_call.1} parent=5 // pred_check
        %p961 = pneg %p960
      $region42: #{tpu_custom_call.1} parent=5 // pred_check_branch
        %963 = sbr.rel (%p961) target = $region44
      $region43: #{tpu_custom_call.1} parent=5 // pred_region
        %s964 = ssub.s32 %s13, 2
        // Predicated region
        $region45: #{tpu_custom_call.1} parent=43 // pred_check
          %p965 = pneg %p158
        $region46: #{tpu_custom_call.1} parent=43 // pred_check_branch
          %967 = sbr.rel (%p965) target = $region48
        $region47: #{tpu_custom_call.1} parent=43 // pred_region
          %s968 = sand.u32 %s143, 1
          %s969 = scalar_lea.sflag [#allocation3], %s968
          %s970 = sand.u32 %s143, 1
          %s971 = smul.addr %s970, 4
          %s972 = scalar_lea.vmem [#allocation2], %s971
          %973 = dma.done %s969, 64
        $region48: #{tpu_custom_call.1} parent=43 // pred_fallthru
          _
      $region44: #{tpu_custom_call.1} parent=5 // pred_fallthru
        _
    $region6: #{tpu_custom_call.1} parent=1 // loop_footer
      %s17 = sadd.s32 1, %s13
    $region7: #{tpu_custom_call.1} parent=1 // loop_footer_branch
      %12 = sbr.rel target = $region3
    $region8: #{tpu_custom_call.1} parent=1 // loop_exit
      _
    %974 = vsyncpa [#allocation3], 1
    %s975 = scalar_lea.sflag [#allocation3], 1
    %976 = vsyncpa %s975, 1

</llo_original>
